<compile_context>
chip_gen: v6e
topology: v6e:2x2x1
jax: 0.10.0
libtpu: 0.0.40
codegen_flags: <defaults>
</compile_context>

<pallas_src>
import math

import jax
import jax.numpy as jnp
from jax.experimental import pallas as pl
from jax.experimental.pallas import tpu as pltpu

KSIZE = 3  # Conv1d kernel_size=3, padding=2, then [..., :-2]  ==  causal conv


def _round_up(n, m):
    return (n + m - 1) // m * m


def ets_embed_kernel(x_ref, w_ref, o_ref):
    """One (TM, KC) x (KC, TD) -> (TM, TD) tile of the fused causal conv.

    x_ref: (TM, KC)  im2col'd input rows (bf16 or f32)
    w_ref: (KC, TD)  flattened conv taps (bf16 or f32)
    o_ref: (TM, TD)  output tile (f32), lane-dense (TD multiple of 128)
    """
    o_ref[...] = jnp.dot(
        x_ref[...], w_ref[...], preferred_element_type=jnp.float32
    ).astype(o_ref.dtype)


def ets_embedding(x, conv_weight, *, compute_dtype=jnp.bfloat16,
                  row_tile=256, d_tile=512):
    """x: (B, L, C_in); conv_weight: (d_model, c_in, K) as in nn.Conv1d (no bias)."""
    B, L, C = x.shape
    D = conv_weight.shape[0]
    K = KSIZE
    M = B * L
    KC = K * C

    # --- im2col in the wrapper: causal taps x[t-2], x[t-1], x[t] per output row.
    xc = x.astype(compute_dtype)
    xp = jnp.pad(xc, ((0, 0), (K - 1, 0), (0, 0)))                 # (B, L+2, C)
    cols = [xp[:, j:j + L, :] for j in range(K)]                   # tap j -> x[t+j-2]
    x_col = jnp.concatenate(cols, axis=-1).reshape(M, KC)          # (B*L, K*C)

    # --- weight: (D, C, K) -> (K*C, D), column layout matching x_col.
    w_flat = jnp.transpose(conv_weight, (2, 1, 0)).reshape(KC, D)
    w_flat = w_flat.astype(compute_dtype)

    # --- pad to tile-friendly shapes (zero padding does not change the math).
    KCp = _round_up(KC, 8)                   # sublane-aligned contraction
    Dp = _round_up(D, 128)                   # lane-dense output stores
    Mp = _round_up(M, 8)
    tm = Mp if Mp <= row_tile else row_tile
    Mp = _round_up(M, tm)
    if Dp % d_tile == 0:
        td = d_tile
    elif Dp % 256 == 0:
        td = 256
    else:
        td = 128

    x_col = jnp.pad(x_col, ((0, Mp - M), (0, KCp - KC)))
    w_flat = jnp.pad(w_flat, ((0, KCp - KC), (0, Dp - D)))

    out = pl.pallas_call(
        ets_embed_kernel,
        out_shape=jax.ShapeDtypeStruct((Mp, Dp), x.dtype),
        grid_spec=pltpu.PrefetchScalarGridSpec(
            num_scalar_prefetch=0,
            grid=(Mp // tm, Dp // td),
            in_specs=[
                pl.BlockSpec((tm, KCp), lambda i, j: (i, 0)),
                pl.BlockSpec((KCp, td), lambda i, j: (0, j)),
            ],
            out_specs=pl.BlockSpec((tm, td), lambda i, j: (i, j)),
        ),
        compiler_params=pltpu.CompilerParams(
            dimension_semantics=("parallel", "parallel"),
        ),
    )(x_col, w_flat)

    return out[:M, :D].reshape(B, L, D)


class Model:
    """Eval-mode forward of ETSformer's `Model` (provided components only)."""

    def __init__(self, seq_len, enc_in, d_model, key):
        self.seq_len = seq_len
        self.enc_in = enc_in
        self.d_model = d_model
        # nn.init.kaiming_normal_(conv.weight): fan_in = c_in * K, gain = sqrt(2)
        fan_in = enc_in * KSIZE
        std = math.sqrt(2.0 / fan_in)
        self.conv_weight = std * jax.random.normal(
            key, (d_model, enc_in, KSIZE), dtype=jnp.float32)

    def forward(self, x_enc, x_mark_enc=None, x_dec=None, x_mark_dec=None,
                mask=None):
        # self.training == False: Transform skipped, Dropout is identity.
        res = self.enc_embedding(x_enc)
        # TODO(synk): level/growth/season encoder-decoder stack not provided;
        #             return the embedded representation that feeds it.
        return res

    def enc_embedding(self, x_enc):
        return ets_embedding(x_enc, self.conv_weight)


def _reference_embedding(x, w):
    """Pure-JAX f32 reference of ETSEmbedding (eval mode)."""
    B, L, C = x.shape
    D = w.shape[0]
    xp = jnp.pad(x, ((0, 0), (KSIZE - 1, 0), (0, 0)))
    y = jnp.zeros((B, L, D), jnp.float32)
    for j in range(KSIZE):
        y = y + jnp.einsum("blc,dc->bld", xp[:, j:j + L, :], w[:, :, j])
    return y


if __name__ == "__main__":
    key = jax.random.PRNGKey(0)
    k_w, k_x = jax.random.split(key)

    B, L, C_IN, D_MODEL = 2, 8, 4, 32  # batch, seq_len, enc_in, d_model

    model = Model(seq_len=L, enc_in=C_IN, d_model=D_MODEL, key=k_w)
    x_enc = jax.random.normal(k_x, (B, L, C_IN), dtype=jnp.float32)

    # Default (recommended) bf16-operand / f32-accumulate path.
    out = jax.block_until_ready(model.forward(x_enc))
    # f32-operand path for a tight numerical check of the kernel structure.
    out_f32 = jax.block_until_ready(
        ets_embedding(x_enc, model.conv_weight, compute_dtype=jnp.float32))

    ref = _reference_embedding(x_enc, model.conv_weight)
    assert out.shape == (B, L, D_MODEL)
    assert jnp.allclose(out_f32, ref, atol=1e-5, rtol=1e-5), "f32 mismatch vs ref"
    assert jnp.allclose(out, ref, atol=3e-2, rtol=3e-2), "bf16 mismatch vs ref"

    print("KERNEL_OK")
</pallas_src>

<mosaic_0001>
module attributes {stable_mosaic.version = 11 : i64} {
  func.func @ets_embed_kernel(%arg0: i32, %arg1: i32, %arg2: memref<16x16xbf16, #tpu.memory_space<vmem>>, %arg3: memref<16x128xbf16, #tpu.memory_space<vmem>>, %arg4: memref<16x128xf32, #tpu.memory_space<vmem>>) attributes {dimension_semantics = [#tpu.dimension_semantics<parallel>, #tpu.dimension_semantics<parallel>], iteration_bounds = array<i64: 1, 1>, scalar_prefetch = 0 : i64, scratch_operands = 0 : i64, tpu.core_type = #tpu.core_type<tc>, window_params = [{transform_indices = @transform_0, window_bounds = array<i64: 16, 16>}, {transform_indices = @transform_1, window_bounds = array<i64: 16, 128>}, {transform_indices = @transform_2, window_bounds = array<i64: 16, 128>}]} {
    %c0 = arith.constant 0 : index
    %c0_0 = arith.constant 0 : index
    %0 = vector.load %arg2[%c0, %c0_0] : memref<16x16xbf16, #tpu.memory_space<vmem>>, vector<16x16xbf16>
    %c0_1 = arith.constant 0 : index
    %c0_2 = arith.constant 0 : index
    %1 = vector.load %arg3[%c0_1, %c0_2] : memref<16x128xbf16, #tpu.memory_space<vmem>>, vector<16x128xbf16>
    %cst = arith.constant dense<0.000000e+00> : vector<16x128xf32>
    %2 = tpu.matmul %0, %1, %cst {dimension_numbers = #tpu.dot_dimension_numbers<[1], [0], [0], [1], [0, 0, 1, 1], [], []>} : vector<16x16xbf16>, vector<16x128xbf16>, vector<16x128xf32> -> vector<16x128xf32>
    %c0_3 = arith.constant 0 : index
    %c0_4 = arith.constant 0 : index
    %3 = vector.load %arg4[%c0_3, %c0_4] : memref<16x128xf32, #tpu.memory_space<vmem>>, vector<16x128xf32>
    tpu.vector_store %arg4[%c0_3, %c0_4], %2 {strides = array<i32>} : memref<16x128xf32, #tpu.memory_space<vmem>>, vector<16x128xf32>,
    return
  }
  func.func @transform_0(%arg0: i32, %arg1: i32) -> (i32, i32) {
    %c0_i32 = arith.constant 0 : i32
    %c0_i32_0 = arith.constant 0 : i32
    return %arg0, %c0_i32 : i32, i32
  }
  func.func @transform_1(%arg0: i32, %arg1: i32) -> (i32, i32) {
    %c0_i32 = arith.constant 0 : i32
    %c0_i32_0 = arith.constant 0 : i32
    return %c0_i32, %arg1 : i32, i32
  }
  func.func @transform_2(%arg0: i32, %arg1: i32) -> (i32, i32) {
    %c0_i32 = arith.constant 0 : i32
    return %arg0, %arg1 : i32, i32
  }
}

</mosaic_0001>

<llo_original>
// kernel: tpu_custom_call.1
$region0: #{tpu_custom_call.1}
  #allocation0 [shape = 'u32[]', space=smem, size = 0x4, offset = 0x4, fixed_abs, tag = 'smem constant byte address 0x4 - core index']
  #allocation1 [shape = 'u32[144,128]{1,0:T(1,128)}', space=vmem, size = 0x12000, scoped, tag = 'internal scratch']
  %s0 = inlined_call_operand.hbm [shape: bf16[16,16], index: 0, kind: input, shape index: {}]
  %s1 = inlined_call_operand.hbm [shape: bf16[16,128], index: 1, kind: input, shape index: {}]
  %s2 = inlined_call_operand.hbm [shape: f32[16,128], index: 2, kind: output, shape index: {}]
  %s3 = sld [smem:[#allocation0]]
  $region26: #{tpu_custom_call.1} parent=0
    _
  %s5 = ssub.s32 1, %s3
  %s6 = scalar_select 0, %s5, %s3
  $region1: #{tpu_custom_call.1} parent=0
    #allocation2 [shape = 'u8[4096]{0}', space=vmem, size = 0x1000, scoped, tag = 'input window, operand 0, single buffered']
    #allocation3 [shape = 's32[1]{0}', space=sflag, size = 0x4, scoped, tag = 'scoped memory for tpu_custom_call.1']
    #allocation4 [shape = 's32[1]{0}', space=sflag, size = 0x4, scoped, tag = 'scoped memory for tpu_custom_call.1']
    #allocation5 [shape = 'u8[4096]{0}', space=vmem, size = 0x1000, scoped, tag = 'input window, operand 1, single buffered']
    #allocation6 [shape = 's32[1]{0}', space=sflag, size = 0x4, scoped, tag = 'scoped memory for tpu_custom_call.1']
    #allocation7 [shape = 'u8[8192]{0}', space=vmem, size = 0x2000, scoped, tag = 'output window, operand 0, single buffered']
    %7 = vsyncpa [#allocation3], 0
    %8 = vsyncpa [#allocation6], 0
    %9 = vsyncpa [#allocation4], 0
    // Predicated region
    $region2: #{tpu_custom_call.1} parent=1 // pred_check
      _
    $region3: #{tpu_custom_call.1} parent=1 // pred_check_branch
      %11 = sbr.rel (0) target = $region5
    $region4: #{tpu_custom_call.1} parent=1 // pred_region
      %s13 = ssub.s32 128, 128
      %14 = vsyncadd [#allocation3], %s13
      %s15 = sshll.u32 [#allocation2], 4
      %s16 = int_to_ptr.vmem [resolvable:$true] %s15
      %21 = dma.hbm_to_vmem [thread:$0]  %s0, 128, %s16, [#allocation3], 64, 64, 4
    $region5: #{tpu_custom_call.1} parent=1 // pred_fallthru
      _
    // Predicated region
    $region6: #{tpu_custom_call.1} parent=1 // pred_check
      _
    $region7: #{tpu_custom_call.1} parent=1 // pred_check_branch
      %23 = sbr.rel (0) target = $region9
    $region8: #{tpu_custom_call.1} parent=1 // pred_region
      %s25 = ssub.s32 128, 128
      %26 = vsyncadd [#allocation6], %s25
      %s27 = sshll.u32 [#allocation5], 4
      %s28 = int_to_ptr.vmem [resolvable:$true] %s27
      %33 = dma.hbm_to_vmem [thread:$0]  %s1, 128, %s28, [#allocation6], 64, 64, 4
    $region9: #{tpu_custom_call.1} parent=1 // pred_fallthru
      _
    // Predicated region
    $region10: #{tpu_custom_call.1} parent=1 // pred_check
      _
    $region11: #{tpu_custom_call.1} parent=1 // pred_check_branch
      %35 = sbr.rel (0) target = $region13
    $region12: #{tpu_custom_call.1} parent=1 // pred_region
      %36 = dma.done [#allocation3], 128
    $region13: #{tpu_custom_call.1} parent=1 // pred_fallthru
      _
    // Predicated region
    $region14: #{tpu_custom_call.1} parent=1 // pred_check
      _
    $region15: #{tpu_custom_call.1} parent=1 // pred_check_branch
      %38 = sbr.rel (0) target = $region17
    $region16: #{tpu_custom_call.1} parent=1 // pred_region
      %39 = dma.done [#allocation6], 128
    $region17: #{tpu_custom_call.1} parent=1 // pred_fallthru
      _
    %v41 = vld [vmem:[#allocation2] sm:$0xf]
    %v42 = vld [vmem:[#allocation2 + $0x4] sm:$0xf]
    %v43 = vld [vmem:[#allocation5] sm:$0xf]
    %v44 = vld [vmem:[#allocation5 + $0x4] sm:$0xf]
    %v47 = vunpack.c.l.b16 %v41
    %v48 = vunpack.c.l.b16 %v42
    %v49 = vpack.c.b16 %v48, %v47
    %v52 = vunpack.c.l.b16 %v43
    %v53 = vunpack.c.l.b16 %v44
    %v54 = vpack.c.b16 %v53, %v52
    %vm56 = vcmask 130048
    %v58 = vsel %vm56, %v49, 0
    %60 = vmatprep.subr.bf16.mxu0 0
    %61 = vmatpush1.bf16.msra.mxu0 0
    %62 = vmatprep.subr.bf16.mxu0 0
    %63 = vmatpush1.bf16.msra.mxu0 0
    %64 = vmatprep.subr.bf16.mxu0 0
    %65 = vmatpush1.bf16.msra.mxu0 0
    %66 = vmatprep.subr.bf16.mxu0 0
    %67 = vmatpush1.bf16.msra.mxu0 0
    %68 = vmatprep.subr.bf16.mxu0 0
    %69 = vmatpush1.bf16.msra.mxu0 0
    %70 = vmatprep.subr.bf16.mxu0 0
    %71 = vmatpush1.bf16.msra.mxu0 0
    %72 = vmatprep.subr.bf16.mxu0 0
    %73 = vmatpush1.bf16.msra.mxu0 0
    %74 = vmatprep.subr.bf16.mxu0 0
    %75 = vmatpush1.bf16.msra.mxu0 %v54
    %76 = vmatprep.subr.bf16.mxu0 0
    %77 = vmatpush2.bf16.msra.mxu0 0
    %78 = vmatprep.subr.bf16.mxu0 0
    %79 = vmatpush2.bf16.msra.mxu0 0
    %80 = vmatprep.subr.bf16.mxu0 0
    %81 = vmatpush2.bf16.msra.mxu0 0
    %82 = vmatprep.subr.bf16.mxu0 0
    %83 = vmatpush2.bf16.msra.mxu0 0
    %84 = vmatprep.subr.bf16.mxu0 0
    %85 = vmatpush2.bf16.msra.mxu0 0
    %86 = vmatprep.subr.bf16.mxu0 0
    %87 = vmatpush2.bf16.msra.mxu0 0
    %88 = vmatprep.subr.bf16.mxu0 0
    %89 = vmatpush2.bf16.msra.mxu0 0
    %90 = vmatprep.subr.bf16.mxu0 0
    %91 = vmatpush2.bf16.msra.mxu0 0
    %92 = vmatprep.mubr.bf16.mxu0 0
    %93 = vmatmul.mubr.bf16.gmra.mxu0 %v58
    %v94 = vpop.f32.mrf.mxu0
    %v95 = vadd.f32 0.0, %v94
    %v96 = vpop.f32.mrf.mxu0
    %v97 = vpop.f32.mrf.mxu0
    %v98 = vadd.f32 0.0, %v97
    %v99 = vpop.f32.mrf.mxu0
    %100 = vdwg.mxu0
    %101 = vst [vmem:[#allocation7] sm:$0xff] %v95
    %102 = vst [vmem:[#allocation7 + $0x8] sm:$0xff] %v98
    // Predicated region
    $region18: #{tpu_custom_call.1} parent=1 // pred_check
      _
    $region19: #{tpu_custom_call.1} parent=1 // pred_check_branch
      %104 = sbr.rel (0) target = $region21
    $region20: #{tpu_custom_call.1} parent=1 // pred_region
      %s106 = ssub.s32 256, 256
      %107 = vsyncadd [#allocation4], %s106
      %s108 = sshll.u32 [#allocation7], 4
      %s109 = int_to_ptr.vmem [resolvable:$true] %s108
      %114 = dma.vmem_to_hbm [thread:$0]  %s109, 256, %s2, [#allocation4], 128, 128, 8
    $region21: #{tpu_custom_call.1} parent=1 // pred_fallthru
      _
    // Predicated region
    $region22: #{tpu_custom_call.1} parent=1 // pred_check
      _
    $region23: #{tpu_custom_call.1} parent=1 // pred_check_branch
      %116 = sbr.rel (0) target = $region25
    $region24: #{tpu_custom_call.1} parent=1 // pred_region
      %117 = dma.done [#allocation4], 256
    $region25: #{tpu_custom_call.1} parent=1 // pred_fallthru
      _
    %118 = vsyncpa [#allocation3], 1
    %119 = vsyncpa [#allocation6], 1
    %120 = vsyncpa [#allocation4], 1

</llo_original>
